<compile_context>
chip_gen: v7x
topology: tpu7x:2x2x1
jax: 0.10.0
libtpu: 0.0.40
codegen_flags: <defaults>
</compile_context>

<pallas_src>
import jax
import jax.numpy as jnp
from jax.experimental import pallas as pl
from jax.experimental.pallas import tpu as pltpu


def _mlp_softmax_kernel(x_ref, w1_ref, w2_ref, w3_ref, o_ref):
    # Feature-major, lane-dense layout: batch on the 128-lane axis.
    #   x_ref : (2, TB)  f32   (input, transposed)
    #   w1_ref: (10, 2)  f32   fc1.weight  (out_features, in_features)
    #   w2_ref: (50, 10) f32   fc2.weight
    #   w3_ref: (4, 50)  f32   fc3.weight
    #   o_ref : (4, TB)  f32   softmax output (transposed)
    x = x_ref[...]                                               # (2, TB)
    w1 = w1_ref[...]                                             # (10, 2)

    # ---- fc1 (contraction K=2) on the VPU: broadcast-mul-add, no MXU. ----
    h1 = w1[:, 0:1] * x[0:1, :] + w1[:, 1:2] * x[1:2, :]         # (10, TB)
    h1 = jnp.maximum(h1, 0.0)                                    # ReLU

    # ---- fc2 (10 -> 50) on the MXU. ----
    h2 = jnp.dot(w2_ref[...], h1,
                 preferred_element_type=jnp.float32)             # (50, TB)
    h2 = jnp.maximum(h2, 0.0)                                    # ReLU

    # ---- fc3 (50 -> 4) on the MXU (replaces 4 XLU lane reductions). ----
    logits = jnp.dot(w3_ref[...], h2,
                     preferred_element_type=jnp.float32)         # (4, TB)

    # ---- softmax over the 4 feature rows (dim=1 of the original (B, 4)).
    #      Pure VPU elementwise on (1, TB) sublane slices — no cross-lane XLU.
    l0 = logits[0:1, :]
    l1 = logits[1:2, :]
    l2 = logits[2:3, :]
    l3 = logits[3:4, :]
    m = jnp.maximum(jnp.maximum(l0, l1), jnp.maximum(l2, l3))    # (1, TB)
    e = jnp.exp(logits - m)                                      # (4, TB)
    denom = e[0:1, :] + e[1:2, :] + e[2:3, :] + e[3:4, :]        # (1, TB)
    # Exact divide on the (1, TB) denominator so rows sum to 1 to f32
    # precision (the approx EUP reciprocal was not accurate enough).
    o_ref[...] = (e * (1.0 / denom)).astype(o_ref.dtype)


def net_forward(x, w1_pt, w2_pt, w3_pt, *, block_b=4096):
    """Forward pass of Net.

    x     : (B, 2) f32
    wK_pt : PyTorch Linear weights in native (out_features, in_features) layout:
            w1_pt (10, 2), w2_pt (50, 10), w3_pt (4, 50).
    Returns (B, 4) f32 softmax probabilities.
    """
    B, in_dim = x.shape
    out_dim = w3_pt.shape[0]

    # Feature-major / lane-dense: batch goes on the 128-lane axis.
    x_t = x.T                                                    # (2, B)

    # Lane-dense batch tile: multiple of 128, or the full batch for small B.
    if B <= block_b:
        tb = B
    else:
        tb = max(128, (min(block_b, B) // 128) * 128)
    grid = (pl.cdiv(B, tb),)

    # Weights: constant-index full-array blocks -> VMEM-resident across steps.
    full = lambda a: pl.BlockSpec(a.shape, lambda i: (0, 0))

    out_t = pl.pallas_call(
        _mlp_softmax_kernel,
        out_shape=jax.ShapeDtypeStruct((out_dim, B), jnp.float32),
        grid=grid,
        in_specs=[
            pl.BlockSpec((in_dim, tb), lambda i: (0, i)),
            full(w1_pt),
            full(w2_pt),
            full(w3_pt),
        ],
        out_specs=pl.BlockSpec((out_dim, tb), lambda i: (0, i)),
        compiler_params=pltpu.CompilerParams(
            # Batch axis is embarrassingly parallel -> sharded across the two
            # TensorCores on v7x; harmless on single-TC v5e/v6e.
            dimension_semantics=("parallel",),
        ),
    )(x_t, w1_pt, w2_pt, w3_pt)

    # Back to the PyTorch-native (B, 4) layout (cheap XLA transpose).
    return out_t.T


def net_forward_ref(x, w1_pt, w2_pt, w3_pt):
    """Pure-JAX reference matching the PyTorch module."""
    h1 = jnp.maximum(x @ w1_pt.T, 0.0)
    h2 = jnp.maximum(h1 @ w2_pt.T, 0.0)
    logits = h2 @ w3_pt.T
    return jax.nn.softmax(logits, axis=1)


def init_params(key):
    """Deterministic init mimicking nn.Linear's kaiming-uniform
    (U[-1/sqrt(fan_in), 1/sqrt(fan_in)]), in PyTorch (out, in) layout."""
    dims = [(10, 2), (50, 10), (4, 50)]   # (out_features, in_features)
    ws = []
    for (fan_out, fan_in) in dims:
        key, sub = jax.random.split(key)
        bound = 1.0 / jnp.sqrt(jnp.float32(fan_in))
        ws.append(jax.random.uniform(sub, (fan_out, fan_in), jnp.float32,
                                     minval=-bound, maxval=bound))
    return ws


if __name__ == "__main__":
    key = jax.random.PRNGKey(0)
    key, xkey = jax.random.split(key)

    B = 256                              # small demo batch; 2 grid steps of 128
    x = jax.random.normal(xkey, (B, 2), jnp.float32)

    w1_pt, w2_pt, w3_pt = init_params(key)

    out = jax.block_until_ready(net_forward(x, w1_pt, w2_pt, w3_pt, block_b=128))
    ref = net_forward_ref(x, w1_pt, w2_pt, w3_pt)

    # sanity: shape, softmax rows sum to 1 (exact divide), matches reference.
    assert out.shape == (B, 4)
    assert jnp.allclose(jnp.sum(out, axis=1), 1.0, atol=1e-5)
    assert jnp.allclose(out, ref, atol=1e-4)

    print("KERNEL_OK")
</pallas_src>

<mosaic_0001>
module attributes {stable_mosaic.version = 11 : i64} {
  func.func @_mlp_softmax_kernel(%arg0: i32, %arg1: memref<2x128xf32, #tpu.memory_space<vmem>>, %arg2: memref<10x2xf32, #tpu.memory_space<vmem>>, %arg3: memref<50x10xf32, #tpu.memory_space<vmem>>, %arg4: memref<4x50xf32, #tpu.memory_space<vmem>>, %arg5: memref<4x128xf32, #tpu.memory_space<vmem>>) attributes {dimension_semantics = [#tpu.dimension_semantics<parallel>], iteration_bounds = array<i64: 2>, scalar_prefetch = 0 : i64, scratch_operands = 0 : i64, tpu.core_type = #tpu.core_type<tc>, window_params = [{transform_indices = @transform_0, window_bounds = array<i64: 2, 128>}, {pipeline_mode = #tpu.pipeline_mode<synchronous>, transform_indices = @transform_1, window_bounds = array<i64: 10, 2>}, {pipeline_mode = #tpu.pipeline_mode<synchronous>, transform_indices = @transform_2, window_bounds = array<i64: 50, 10>}, {pipeline_mode = #tpu.pipeline_mode<synchronous>, transform_indices = @transform_3, window_bounds = array<i64: 4, 50>}, {transform_indices = @transform_4, window_bounds = array<i64: 4, 128>}]} {
    %c0 = arith.constant 0 : index
    %c0_0 = arith.constant 0 : index
    %0 = vector.load %arg1[%c0, %c0_0] : memref<2x128xf32, #tpu.memory_space<vmem>>, vector<2x128xf32>
    %c0_1 = arith.constant 0 : index
    %c0_2 = arith.constant 0 : index
    %1 = vector.load %arg2[%c0_1, %c0_2] : memref<10x2xf32, #tpu.memory_space<vmem>>, vector<10x2xf32>
    %2 = vector.extract_strided_slice %1 {offsets = [0, 0], sizes = [10, 1], strides = [1, 1]} : vector<10x2xf32> to vector<10x1xf32>
    %3 = vector.extract_strided_slice %0 {offsets = [0, 0], sizes = [1, 128], strides = [1, 1]} : vector<2x128xf32> to vector<1x128xf32>
    %4 = vector.broadcast %2 : vector<10x1xf32> to vector<10x128xf32>
    %5 = vector.broadcast %3 : vector<1x128xf32> to vector<10x128xf32>
    %6 = arith.mulf %4, %5 : vector<10x128xf32>
    %7 = vector.extract_strided_slice %1 {offsets = [0, 1], sizes = [10, 1], strides = [1, 1]} : vector<10x2xf32> to vector<10x1xf32>
    %8 = vector.extract_strided_slice %0 {offsets = [1, 0], sizes = [1, 128], strides = [1, 1]} : vector<2x128xf32> to vector<1x128xf32>
    %9 = vector.broadcast %7 : vector<10x1xf32> to vector<10x128xf32>
    %10 = vector.broadcast %8 : vector<1x128xf32> to vector<10x128xf32>
    %11 = arith.mulf %9, %10 : vector<10x128xf32>
    %12 = arith.addf %6, %11 : vector<10x128xf32>
    %cst = arith.constant 0.000000e+00 : f32
    %13 = vector.broadcast %cst : f32 to vector<10x128xf32>
    %14 = arith.maximumf %12, %13 : vector<10x128xf32>
    %c0_3 = arith.constant 0 : index
    %c0_4 = arith.constant 0 : index
    %15 = vector.load %arg3[%c0_3, %c0_4] : memref<50x10xf32, #tpu.memory_space<vmem>>, vector<50x10xf32>
    %cst_5 = arith.constant dense<0.000000e+00> : vector<50x128xf32>
    %16 = tpu.matmul %15, %14, %cst_5 {dimension_numbers = #tpu.dot_dimension_numbers<[1], [0], [0], [1], [0, 0, 1, 1], [], []>} : vector<50x10xf32>, vector<10x128xf32>, vector<50x128xf32> -> vector<50x128xf32>
    %cst_6 = arith.constant 0.000000e+00 : f32
    %17 = vector.broadcast %cst_6 : f32 to vector<50x128xf32>
    %18 = arith.maximumf %16, %17 : vector<50x128xf32>
    %c0_7 = arith.constant 0 : index
    %c0_8 = arith.constant 0 : index
    %19 = vector.load %arg4[%c0_7, %c0_8] : memref<4x50xf32, #tpu.memory_space<vmem>>, vector<4x50xf32>
    %cst_9 = arith.constant dense<0.000000e+00> : vector<4x128xf32>
    %20 = tpu.matmul %19, %18, %cst_9 {dimension_numbers = #tpu.dot_dimension_numbers<[1], [0], [0], [1], [0, 0, 1, 1], [], []>} : vector<4x50xf32>, vector<50x128xf32>, vector<4x128xf32> -> vector<4x128xf32>
    %21 = vector.extract_strided_slice %20 {offsets = [0, 0], sizes = [1, 128], strides = [1, 1]} : vector<4x128xf32> to vector<1x128xf32>
    %22 = vector.extract_strided_slice %20 {offsets = [1, 0], sizes = [1, 128], strides = [1, 1]} : vector<4x128xf32> to vector<1x128xf32>
    %23 = vector.extract_strided_slice %20 {offsets = [2, 0], sizes = [1, 128], strides = [1, 1]} : vector<4x128xf32> to vector<1x128xf32>
    %24 = vector.extract_strided_slice %20 {offsets = [3, 0], sizes = [1, 128], strides = [1, 1]} : vector<4x128xf32> to vector<1x128xf32>
    %25 = arith.maximumf %21, %22 : vector<1x128xf32>
    %26 = arith.maximumf %23, %24 : vector<1x128xf32>
    %27 = arith.maximumf %25, %26 : vector<1x128xf32>
    %28 = vector.broadcast %27 : vector<1x128xf32> to vector<4x128xf32>
    %29 = arith.subf %20, %28 : vector<4x128xf32>
    %30 = math.exp %29 : vector<4x128xf32>
    %31 = vector.extract_strided_slice %30 {offsets = [0, 0], sizes = [1, 128], strides = [1, 1]} : vector<4x128xf32> to vector<1x128xf32>
    %32 = vector.extract_strided_slice %30 {offsets = [1, 0], sizes = [1, 128], strides = [1, 1]} : vector<4x128xf32> to vector<1x128xf32>
    %33 = arith.addf %31, %32 : vector<1x128xf32>
    %34 = vector.extract_strided_slice %30 {offsets = [2, 0], sizes = [1, 128], strides = [1, 1]} : vector<4x128xf32> to vector<1x128xf32>
    %35 = arith.addf %33, %34 : vector<1x128xf32>
    %36 = vector.extract_strided_slice %30 {offsets = [3, 0], sizes = [1, 128], strides = [1, 1]} : vector<4x128xf32> to vector<1x128xf32>
    %37 = arith.addf %35, %36 : vector<1x128xf32>
    %cst_10 = arith.constant 1.000000e+00 : f32
    %38 = vector.broadcast %cst_10 : f32 to vector<1x128xf32>
    %39 = arith.divf %38, %37 : vector<1x128xf32>
    %40 = vector.broadcast %39 : vector<1x128xf32> to vector<4x128xf32>
    %41 = arith.mulf %30, %40 : vector<4x128xf32>
    %c0_11 = arith.constant 0 : index
    %c0_12 = arith.constant 0 : index
    %42 = vector.load %arg5[%c0_11, %c0_12] : memref<4x128xf32, #tpu.memory_space<vmem>>, vector<4x128xf32>
    tpu.vector_store %arg5[%c0_11, %c0_12], %41 {strides = array<i32>} : memref<4x128xf32, #tpu.memory_space<vmem>>, vector<4x128xf32>,
    return
  }
  func.func @transform_0(%arg0: i32) -> (i32, i32) {
    %c0_i32 = arith.constant 0 : i32
    %c0_i32_0 = arith.constant 0 : i32
    return %c0_i32, %arg0 : i32, i32
  }
  func.func @transform_1(%arg0: i32) -> (i32, i32) {
    %c0_i32 = arith.constant 0 : i32
    %c0_i32_0 = arith.constant 0 : i32
    %c0_i32_1 = arith.constant 0 : i32
    return %c0_i32, %c0_i32_0 : i32, i32
  }
  func.func @transform_2(%arg0: i32) -> (i32, i32) {
    %c0_i32 = arith.constant 0 : i32
    %c0_i32_0 = arith.constant 0 : i32
    %c0_i32_1 = arith.constant 0 : i32
    return %c0_i32, %c0_i32_0 : i32, i32
  }
  func.func @transform_3(%arg0: i32) -> (i32, i32) {
    %c0_i32 = arith.constant 0 : i32
    %c0_i32_0 = arith.constant 0 : i32
    %c0_i32_1 = arith.constant 0 : i32
    return %c0_i32, %c0_i32_0 : i32, i32
  }
  func.func @transform_4(%arg0: i32) -> (i32, i32) {
    %c0_i32 = arith.constant 0 : i32
    %c0_i32_0 = arith.constant 0 : i32
    return %c0_i32, %arg0 : i32, i32
  }
}

</mosaic_0001>

<llo_original>
// kernel: tpu_custom_call.1
$region0: #{tpu_custom_call.1}
  #allocation0 [shape = 'u32[]', space=smem, size = 0x4, offset = 0x4, fixed_abs, tag = 'smem constant byte address 0x4 - core index']
  #allocation1 [shape = 'u32[144,128]{1,0:T(1,128)}', space=vmem, size = 0x12000, scoped, tag = 'internal scratch']
  %s0 = inlined_call_operand.vmem [shape: f32[2,256], index: 0, kind: input, shape index: {}]
  %s1 = inlined_call_operand.vmem [shape: f32[10,2], index: 1, kind: input, shape index: {}]
  %s2 = inlined_call_operand.vmem [shape: f32[50,10], index: 2, kind: input, shape index: {}]
  %s3 = inlined_call_operand.vmem [shape: f32[4,50], index: 3, kind: input, shape index: {}]
  %s4 = inlined_call_operand.hbm [shape: f32[4,256], index: 4, kind: output, shape index: {}]
  %s5 = sld [smem:[#allocation0]]
  $region49: #{tpu_custom_call.1} parent=0
    _
  %s7 = ssub.s32 1, %s5
  %s8 = scalar_select 0, %s7, %s5
  $region1: #{tpu_custom_call.1} parent=0
    #allocation2 [shape = 'u8[4096]{0}', space=vmem, size = 0x1000, scoped, tag = 'output window, operand 0']
    #allocation3 [shape = 's32[2]{0}', space=sflag, size = 0x8, scoped, tag = 'scoped memory for tpu_custom_call.1']
    %9 = vsyncpa [#allocation3], 0
    %s10 = scalar_lea.sflag [#allocation3], 1
    %11 = vsyncpa %s10, 0
    loop: start=0, step=1, limit=4
    $region2: #{tpu_custom_call.1} parent=1 // loop_pre_header
      _
    $region3: #{tpu_custom_call.1} parent=1 // loop_header
      %s13 = sphi 0, %s17
      %p14 = scmp.ge.s32.totalorder %s13, 4
      %s23 = sphi 0, %s25
      %s26 = sphi 0, %s23
      %s27 = sphi 0, %s26
      %s43 = sphi 0, %s27
      %s47 = sphi 0, %s47
      %s49 = sphi 0, %s47
      %s50 = sphi 0, %s49
      %s64 = sphi 0, %s50
      %s68 = sphi 0, %s68
      %s70 = sphi 0, %s68
      %s71 = sphi 0, %s70
      %s85 = sphi 0, %s71
      %s89 = sphi 0, %s89
      %s91 = sphi 0, %s89
      %s92 = sphi 0, %s91
      %s106 = sphi 0, %s92
      %s112 = sphi 0, %s114
      %s115 = sphi 0, %s112
      %s116 = sphi 0, %s115
      %s132 = sphi 0, %s116
    $region4: #{tpu_custom_call.1} parent=1 // loop_header_branch
      %16 = sbr.rel (%p14) target = $region8
    $region5: #{tpu_custom_call.1} parent=1 // loop_body
      %s18 = ssub.s32 %s13, 1
      %s19 = ssub.s32 %s13, 2
      %s20 = sadd.s32 %s13, 1
      %s21 = ssub.s32 %s13, %s20
      %p22 = scmp.eq.s32.totalorder %s21, 0
      %s24 = sadd.s32 %s23, 1
      %s25 = scalar_select %p22, %s23, %s24
      %p28 = pneg %p22
      %p29 = scmp.eq.s32.totalorder %s13, 1
      %p30 = por %p28, %p29
      %p31 = scmp.ne.s32.totalorder %s23, %s26
      %p32 = scmp.eq.s32.totalorder %s13, 0
      %p33 = por %p31, %p32
      %p34 = scmp.ne.s32.totalorder %s23, %s26
      %p35 = scmp.eq.s32.totalorder %s18, 1
      %p36 = por %p34, %p35
      %p37 = scmp.ne.s32.totalorder %s26, %s27
      %p38 = scmp.eq.s32.totalorder %s18, 0
      %p39 = por %p37, %p38
      %p40 = scmp.ne.s32.totalorder %s26, %s27
      %p41 = scmp.eq.s32.totalorder %s19, 1
      %p42 = por %p40, %p41
      %p44 = scmp.ne.s32.totalorder %s27, %s43
      %p45 = scmp.eq.s32.totalorder %s19, 0
      %p46 = por %p44, %p45
      %s48 = sadd.s32 %s47, 1
      %p51 = scmp.eq.s32.totalorder %s13, 1
      %p52 = scmp.ne.s32.totalorder %s47, %s49
      %p53 = scmp.eq.s32.totalorder %s13, 0
      %p54 = por %p52, %p53
      %p55 = scmp.ne.s32.totalorder %s47, %s49
      %p56 = scmp.eq.s32.totalorder %s18, 1
      %p57 = por %p55, %p56
      %p58 = scmp.ne.s32.totalorder %s49, %s50
      %p59 = scmp.eq.s32.totalorder %s18, 0
      %p60 = por %p58, %p59
      %p61 = scmp.ne.s32.totalorder %s49, %s50
      %p62 = scmp.eq.s32.totalorder %s19, 1
      %p63 = por %p61, %p62
      %p65 = scmp.ne.s32.totalorder %s50, %s64
      %p66 = scmp.eq.s32.totalorder %s19, 0
      %p67 = por %p65, %p66
      %s69 = sadd.s32 %s68, 1
      %p72 = scmp.eq.s32.totalorder %s13, 1
      %p73 = scmp.ne.s32.totalorder %s68, %s70
      %p74 = scmp.eq.s32.totalorder %s13, 0
      %p75 = por %p73, %p74
      %p76 = scmp.ne.s32.totalorder %s68, %s70
      %p77 = scmp.eq.s32.totalorder %s18, 1
      %p78 = por %p76, %p77
      %p79 = scmp.ne.s32.totalorder %s70, %s71
      %p80 = scmp.eq.s32.totalorder %s18, 0
      %p81 = por %p79, %p80
      %p82 = scmp.ne.s32.totalorder %s70, %s71
      %p83 = scmp.eq.s32.totalorder %s19, 1
      %p84 = por %p82, %p83
      %p86 = scmp.ne.s32.totalorder %s71, %s85
      %p87 = scmp.eq.s32.totalorder %s19, 0
      %p88 = por %p86, %p87
      %s90 = sadd.s32 %s89, 1
      %p93 = scmp.eq.s32.totalorder %s13, 1
      %p94 = scmp.ne.s32.totalorder %s89, %s91
      %p95 = scmp.eq.s32.totalorder %s13, 0
      %p96 = por %p94, %p95
      %p97 = scmp.ne.s32.totalorder %s89, %s91
      %p98 = scmp.eq.s32.totalorder %s18, 1
      %p99 = por %p97, %p98
      %p100 = scmp.ne.s32.totalorder %s91, %s92
      %p101 = scmp.eq.s32.totalorder %s18, 0
      %p102 = por %p100, %p101
      %p103 = scmp.ne.s32.totalorder %s91, %s92
      %p104 = scmp.eq.s32.totalorder %s19, 1
      %p105 = por %p103, %p104
      %p107 = scmp.ne.s32.totalorder %s92, %s106
      %p108 = scmp.eq.s32.totalorder %s19, 0
      %p109 = por %p107, %p108
      %s110 = ssub.s32 %s13, %s20
      %p111 = scmp.eq.s32.totalorder %s110, 0
      %s113 = sadd.s32 %s112, 1
      %s114 = scalar_select %p111, %s112, %s113
      %p117 = pneg %p111
      %p118 = scmp.eq.s32.totalorder %s13, 1
      %p119 = por %p117, %p118
      %p120 = scmp.ne.s32.totalorder %s112, %s115
      %p121 = scmp.eq.s32.totalorder %s13, 0
      %p122 = por %p120, %p121
      %p123 = scmp.ne.s32.totalorder %s112, %s115
      %p124 = scmp.eq.s32.totalorder %s18, 1
      %p125 = por %p123, %p124
      %p126 = scmp.ne.s32.totalorder %s115, %s116
      %p127 = scmp.eq.s32.totalorder %s18, 0
      %p128 = por %p126, %p127
      %p129 = scmp.ne.s32.totalorder %s115, %s116
      %p130 = scmp.eq.s32.totalorder %s19, 1
      %p131 = por %p129, %p130
      %p133 = scmp.ne.s32.totalorder %s116, %s132
      %p134 = scmp.eq.s32.totalorder %s19, 0
      %p135 = por %p133, %p134
      %p136 = scmp.le.s32.totalorder 1, %s13
      %p137 = scmp.lt.s32.totalorder %s13, 3
      %p138 = pnand %p136, %p137
      %p139 = pneg %p138
      // Predicated region
      $region9: #{tpu_custom_call.1} parent=5 // pred_check
        _
      $region10: #{tpu_custom_call.1} parent=5 // pred_check_branch
        %141 = sbr.rel (%p138) target = $region12
      $region11: #{tpu_custom_call.1} parent=5 // pred_region
        %s142 = ssub.s32 %s13, 1
        // Predicated region
        $region13: #{tpu_custom_call.1} parent=11 // pred_check
          %p143 = pneg %p60
        $region14: #{tpu_custom_call.1} parent=11 // pred_check_branch
          %145 = sbr.rel (%p143) target = $region16
        $region15: #{tpu_custom_call.1} parent=11 // pred_region
          _
        $region16: #{tpu_custom_call.1} parent=11 // pred_fallthru
          _
        // Predicated region
        $region17: #{tpu_custom_call.1} parent=11 // pred_check
          %p146 = pneg %p81
        $region18: #{tpu_custom_call.1} parent=11 // pred_check_branch
          %148 = sbr.rel (%p146) target = $region20
        $region19: #{tpu_custom_call.1} parent=11 // pred_region
          _
        $region20: #{tpu_custom_call.1} parent=11 // pred_fallthru
          _
        // Predicated region
        $region21: #{tpu_custom_call.1} parent=11 // pred_check
          %p149 = pneg %p102
        $region22: #{tpu_custom_call.1} parent=11 // pred_check_branch
          %151 = sbr.rel (%p149) target = $region24
        $region23: #{tpu_custom_call.1} parent=11 // pred_region
          _
        $region24: #{tpu_custom_call.1} parent=11 // pred_fallthru
          _
      $region12: #{tpu_custom_call.1} parent=5 // pred_fallthru
        _
      %p152 = scmp.lt.s32.totalorder %s13, 2
      // Predicated region
      $region25: #{tpu_custom_call.1} parent=5 // pred_check
        %p153 = pneg %p152
      $region26: #{tpu_custom_call.1} parent=5 // pred_check_branch
        %155 = sbr.rel (%p153) target = $region28
      $region27: #{tpu_custom_call.1} parent=5 // pred_region
        // Predicated region
        $region29: #{tpu_custom_call.1} parent=27 // pred_check
          %p156 = pneg %p33
        $region30: #{tpu_custom_call.1} parent=27 // pred_check_branch
          %158 = sbr.rel (%p156) target = $region32
        $region31: #{tpu_custom_call.1} parent=27 // pred_region
          %p159 = scmp.lt.s32.totalorder %s13, 1
          %s160 = scalar_select %p159, %s13, 1
          %s161 = smul.addr %s160, 2
          %s162 = scalar_lea.vmem %s0, %s161
        $region32: #{tpu_custom_call.1} parent=27 // pred_fallthru
          _
      $region28: #{tpu_custom_call.1} parent=5 // pred_fallthru
        _
      %p163 = scmp.le.s32.totalorder 1, %s13
      %p164 = scmp.lt.s32.totalorder %s13, 3
      %p165 = pnand %p163, %p164
      %p166 = pneg %p165
      // Predicated region
      $region33: #{tpu_custom_call.1} parent=5 // pred_check
        _
      $region34: #{tpu_custom_call.1} parent=5 // pred_check_branch
        %168 = sbr.rel (%p165) target = $region36
      $region35: #{tpu_custom_call.1} parent=5 // pred_region
        %s169 = ssub.s32 %s13, 1
        %p170 = scmp.lt.s32.totalorder %s18, 1
        %s171 = scalar_select %p170, %s18, 1
        %s172 = smul.addr %s171, 2
        %s173 = scalar_lea.vmem %s0, %s172
        %p174 = pneg %p39
        %p175 = pneg %p36
        %p176 = pneg %p60
        %p177 = pneg %p57
        %p178 = pneg %p81
        %p179 = pneg %p78
        %p180 = pneg %p102
        %p181 = pneg %p99
        %p182 = pneg %p128
        %p183 = pneg %p125
        %s184 = sand.u32 %s115, 1
        %s185 = scalar_lea.sflag [#allocation3], %s184
        %s186 = sand.u32 %s115, 1
        %s187 = smul.addr %s186, 4
        %s188 = scalar_lea.vmem [#allocation2], %s187
        %p189 = scmp.lt.s32.totalorder %s18, 1
        %s190 = scalar_select %p189, %s18, 1
        %s191 = smul.addr %s190, 2
        %s192 = scalar_lea.vmem %s0, %s191
        %v193 = vld [vmem:[%s192] sm:$0x3]
        %v194 = vld [vmem:[%s1] sm:$0xff]
        %v195 = vld [vmem:[%s1 + $0x8] sm:$0x3]
        %197 = vset.pattern.permute.xlu0 0
        %198 = vperm.xlu0 %197, %v194
        %v199 = vpop.permute.xlu0 %198
        %202 = vset.pattern.permute.xlu0 0
        %203 = vperm.xlu0 %202, %v195
        %v204 = vpop.permute.xlu0 %203
        %v206 = vlaneseq
        %v207 = vshrl.u32 %v206, 7
        %v208 = vsub.s32 0, %v207
        %v209 = vrot.slane %v193, %v208
        %v210 = vmul.f32 %v199, %v209
        %v211 = vmul.f32 %v204, %v209
        %212 = vset.pattern.permute.xlu0 1
        %213 = vperm.xlu0 %212, %v194
        %v214 = vpop.permute.xlu0 %213
        %216 = vset.pattern.permute.xlu0 1
        %217 = vperm.xlu0 %216, %v195
        %v218 = vpop.permute.xlu0 %217
        %v220 = vlaneseq
        %v221 = vshrl.u32 %v220, 7
        %v222 = vsub.s32 1, %v221
        %v223 = vrot.slane %v193, %v222
        %v224 = vmul.f32 %v214, %v223
        %v225 = vmul.f32 %v218, %v223
        %v226 = vadd.f32 %v210, %v224
        %v227 = vadd.f32 %v211, %v225
        %v228 = vmax.f32 %v226, 0.0
        %v229 = vmax.f32 %v227, 0.0
        %v230 = vld [vmem:[%s2] sm:$0xff]
        %v231 = vld [vmem:[%s2 + $0x8] sm:$0xff]
        %v232 = vld [vmem:[%s2 + $0x10] sm:$0xff]
        %v233 = vld [vmem:[%s2 + $0x18] sm:$0xff]
        %v234 = vld [vmem:[%s2 + $0x20] sm:$0xff]
        %v235 = vld [vmem:[%s2 + $0x28] sm:$0xff]
        %v236 = vld [vmem:[%s2 + $0x30] sm:$0x3]
        %vm237 = vcmask 80896
        %v239 = vsel %vm237, %v230, 0
        %v242 = vsel %vm237, %v231, 0
        %v245 = vsel %vm237, %v232, 0
        %v248 = vsel %vm237, %v233, 0
        %v251 = vsel %vm237, %v234, 0
        %v254 = vsel %vm237, %v235, 0
        %v257 = vsel %vm237, %v236, 0
        %vm259 = vcmask 1041408
        %v261 = vsel %vm259, %v229, 0
        %263 = vmatprep.subr.mxu0 0.0
        %264 = vmatpush1.msra.mxu0 %v228
        %265 = vmatprep.subr.mxu0 0.0
        %266 = vmatpush1.msra.mxu0 %v261
        %267 = vmatprep.subr.mxu0 0.0
        %268 = vmatpush1.msra.mxu0 0.0
        %269 = vmatprep.subr.mxu0 0.0
        %270 = vmatpush1.msra.mxu0 0.0
        %271 = vmatprep.subr.mxu0 0.0
        %272 = vmatpush1.msra.mxu0 0.0
        %273 = vmatprep.subr.mxu0 0.0
        %274 = vmatpush1.msra.mxu0 0.0
        %275 = vmatprep.subr.mxu0 0.0
        %276 = vmatpush1.msra.mxu0 0.0
        %277 = vmatprep.subr.mxu0 0.0
        %278 = vmatpush1.msra.mxu0 0.0
        %279 = vmatprep.subr.mxu0 0.0
        %280 = vmatpush1.msra.mxu0 0.0
        %281 = vmatprep.subr.mxu0 0.0
        %282 = vmatpush1.msra.mxu0 0.0
        %283 = vmatprep.subr.mxu0 0.0
        %284 = vmatpush1.msra.mxu0 0.0
        %285 = vmatprep.subr.mxu0 0.0
        %286 = vmatpush1.msra.mxu0 0.0
        %287 = vmatprep.subr.mxu0 0.0
        %288 = vmatpush1.msra.mxu0 0.0
        %289 = vmatprep.subr.mxu0 0.0
        %290 = vmatpush1.msra.mxu0 0.0
        %291 = vmatprep.subr.mxu0 0.0
        %292 = vmatpush1.msra.mxu0 0.0
        %293 = vmatprep.subr.mxu0 0.0
        %294 = vmatpush1.msra.mxu0 0.0
        %295 = vmatprep.subr.mxu0 0.0
        %296 = vmatpush1.msra.mxu0 0.0
        %297 = vmatprep.subr.mxu0 0.0
        %298 = vmatpush1.msra.mxu0 0.0
        %299 = vmatprep.subr.mxu0 0.0
        %300 = vmatpush1.msra.mxu0 0.0
        %301 = vmatprep.subr.mxu0 0.0
        %302 = vmatpush1.msra.mxu0 0.0
        %303 = vmatprep.subr.mxu0 0.0
        %304 = vmatpush1.msra.mxu0 0.0
        %305 = vmatprep.subr.mxu0 0.0
        %306 = vmatpush1.msra.mxu0 0.0
        %307 = vmatprep.subr.mxu0 0.0
        %308 = vmatpush1.msra.mxu0 0.0
        %309 = vmatprep.subr.mxu0 0.0
        %310 = vmatpush1.msra.mxu0 0.0
        %311 = vmatprep.subr.mxu0 0.0
        %312 = vmatpush1.msra.mxu0 0.0
        %313 = vmatprep.subr.mxu0 0.0
        %314 = vmatpush1.msra.mxu0 0.0
        %315 = vmatprep.subr.mxu0 0.0
        %316 = vmatpush1.msra.mxu0 0.0
        %317 = vmatprep.subr.mxu0 0.0
        %318 = vmatpush1.msra.mxu0 0.0
        %319 = vmatprep.subr.mxu0 0.0
        %320 = vmatpush1.msra.mxu0 0.0
        %321 = vmatprep.subr.mxu0 0.0
        %322 = vmatpush1.msra.mxu0 0.0
        %323 = vmatprep.subr.mxu0 0.0
        %324 = vmatpush1.msra.mxu0 0.0
        %325 = vmatprep.subr.mxu0 0.0
        %326 = vmatpush1.msra.mxu0 0.0
        %327 = vmatprep.mubr.f32.mxu0 0.0
        %328 = vmatmul.mubr.f32.gmra.mrb[0].mxu0 %v239
        %v329 = vpop.f32.mrb[0].mxu0
        %v330 = vadd.f32 0.0, %v329
        %v331 = vpop.f32.mrb[0].mxu0
        %332 = vmatprep.mubr.f32.mxu0 0.0
        %333 = vmatmul.mubr.f32.gmra.mrb[0].mxu0 %v242
        %v334 = vpop.f32.mrb[0].mxu0
        %v335 = vadd.f32 0.0, %v334
        %v336 = vpop.f32.mrb[0].mxu0
        %337 = vmatprep.mubr.f32.mxu0 0.0
        %338 = vmatmul.mubr.f32.gmra.mrb[0].mxu0 %v245
        %v339 = vpop.f32.mrb[0].mxu0
        %v340 = vadd.f32 0.0, %v339
        %v341 = vpop.f32.mrb[0].mxu0
        %342 = vmatprep.mubr.f32.mxu0 0.0
        %343 = vmatmul.mubr.f32.gmra.mrb[0].mxu0 %v248
        %v344 = vpop.f32.mrb[0].mxu0
        %v345 = vadd.f32 0.0, %v344
        %v346 = vpop.f32.mrb[0].mxu0
        %347 = vmatprep.mubr.f32.mxu0 0.0
        %348 = vmatmul.mubr.f32.gmra.mrb[0].mxu0 %v251
        %v349 = vpop.f32.mrb[0].mxu0
        %v350 = vadd.f32 0.0, %v349
        %v351 = vpop.f32.mrb[0].mxu0
        %352 = vmatprep.mubr.f32.mxu0 0.0
        %353 = vmatmul.mubr.f32.gmra.mrb[0].mxu0 %v254
        %v354 = vpop.f32.mrb[0].mxu0
        %v355 = vadd.f32 0.0, %v354
        %v356 = vpop.f32.mrb[0].mxu0
        %357 = vmatprep.mubr.f32.mxu0 0.0
        %358 = vmatmul.mubr.f32.gmra.mrb[0].mxu0 %v257
        %v359 = vpop.f32.mrb[0].mxu0
        %v360 = vadd.f32 0.0, %v359
        %v361 = vpop.f32.mrb[0].mxu0
        %362 = vdwg.mxu0
        %v363 = vmax.f32 %v330, 0.0
        %v364 = vmax.f32 %v335, 0.0
        %v365 = vmax.f32 %v340, 0.0
        %v366 = vmax.f32 %v345, 0.0
        %v367 = vmax.f32 %v350, 0.0
        %v368 = vmax.f32 %v355, 0.0
        %v369 = vmax.f32 %v360, 0.0
        %v370 = vld [vmem:[%s3] sm:$0xf]
        %vm371 = vcmask 408576
        %v373 = vsel %vm371, %v370, 0
        %v376 = vsel %vm259, %v369, 0
        %378 = vmatprep.subr.mxu0 0.0
        %379 = vmatpush1.msra.mxu0 %v363
        %380 = vmatprep.subr.mxu0 0.0
        %381 = vmatpush1.msra.mxu0 %v364
        %382 = vmatprep.subr.mxu0 0.0
        %383 = vmatpush1.msra.mxu0 %v365
        %384 = vmatprep.subr.mxu0 0.0
        %385 = vmatpush1.msra.mxu0 %v366
        %386 = vmatprep.subr.mxu0 0.0
        %387 = vmatpush1.msra.mxu0 %v367
        %388 = vmatprep.subr.mxu0 0.0
        %389 = vmatpush1.msra.mxu0 %v368
        %390 = vmatprep.subr.mxu0 0.0
        %391 = vmatpush1.msra.mxu0 %v376
        %392 = vmatprep.subr.mxu0 0.0
        %393 = vmatpush1.msra.mxu0 0.0
        %394 = vmatprep.subr.mxu0 0.0
        %395 = vmatpush1.msra.mxu0 0.0
        %396 = vmatprep.subr.mxu0 0.0
        %397 = vmatpush1.msra.mxu0 0.0
        %398 = vmatprep.subr.mxu0 0.0
        %399 = vmatpush1.msra.mxu0 0.0
        %400 = vmatprep.subr.mxu0 0.0
        %401 = vmatpush1.msra.mxu0 0.0
        %402 = vmatprep.subr.mxu0 0.0
        %403 = vmatpush1.msra.mxu0 0.0
        %404 = vmatprep.subr.mxu0 0.0
        %405 = vmatpush1.msra.mxu0 0.0
        %406 = vmatprep.subr.mxu0 0.0
        %407 = vmatpush1.msra.mxu0 0.0
        %408 = vmatprep.subr.mxu0 0.0
        %409 = vmatpush1.msra.mxu0 0.0
        %410 = vmatprep.subr.mxu0 0.0
        %411 = vmatpush1.msra.mxu0 0.0
        %412 = vmatprep.subr.mxu0 0.0
        %413 = vmatpush1.msra.mxu0 0.0
        %414 = vmatprep.subr.mxu0 0.0
        %415 = vmatpush1.msra.mxu0 0.0
        %416 = vmatprep.subr.mxu0 0.0
        %417 = vmatpush1.msra.mxu0 0.0
        %418 = vmatprep.subr.mxu0 0.0
        %419 = vmatpush1.msra.mxu0 0.0
        %420 = vmatprep.subr.mxu0 0.0
        %421 = vmatpush1.msra.mxu0 0.0
        %422 = vmatprep.subr.mxu0 0.0
        %423 = vmatpush1.msra.mxu0 0.0
        %424 = vmatprep.subr.mxu0 0.0
        %425 = vmatpush1.msra.mxu0 0.0
        %426 = vmatprep.subr.mxu0 0.0
        %427 = vmatpush1.msra.mxu0 0.0
        %428 = vmatprep.subr.mxu0 0.0
        %429 = vmatpush1.msra.mxu0 0.0
        %430 = vmatprep.subr.mxu0 0.0
        %431 = vmatpush1.msra.mxu0 0.0
        %432 = vmatprep.subr.mxu0 0.0
        %433 = vmatpush1.msra.mxu0 0.0
        %434 = vmatprep.subr.mxu0 0.0
        %435 = vmatpush1.msra.mxu0 0.0
        %436 = vmatprep.subr.mxu0 0.0
        %437 = vmatpush1.msra.mxu0 0.0
        %438 = vmatprep.subr.mxu0 0.0
        %439 = vmatpush1.msra.mxu0 0.0
        %440 = vmatprep.subr.mxu0 0.0
        %441 = vmatpush1.msra.mxu0 0.0
        %442 = vmatprep.mubr.f32.mxu0 0.0
        %443 = vmatmul.mubr.f32.gmra.mrb[0].mxu0 %v373
        %v444 = vpop.f32.mrb[0].mxu0
        %v445 = vadd.f32 0.0, %v444
        %v446 = vpop.f32.mrb[0].mxu0
        %447 = vdwg.mxu0
        %v449 = vrot.slane %v445, 1
        %v451 = vmax.f32 %v445, %v449
        %v453 = vrot.slane %v451, 2
        %v455 = vmax.f32 %v451, %v453
        %v456 = vlaneseq
        %v457 = vshrl.u32 %v456, 7
        %v458 = vsub.s32 0, %v457
        %v459 = vrot.slane %v455, %v458
        %v460 = vsub.f32 %v445, %v459
        %v461 = vmul.f32 %v460, 1.442695
        %v462 = vpow.pop %v461
        %v464 = vrot.slane %v462, 1
        %v466 = vadd.f32 %v462, %v464
        %v467 = vrot.slane %v462, 2
        %v469 = vadd.f32 %v466, %v467
        %v470 = vrot.slane %v462, 3
        %v472 = vadd.f32 %v469, %v470
        %v473 = vrcp.pop %v472
        %v474 = vmul.f32 1.0, %v473
        %v475 = vlaneseq
        %v476 = vshrl.u32 %v475, 7
        %v477 = vsub.s32 0, %v476
        %v478 = vrot.slane %v474, %v477
        %v479 = vmul.f32 %v462, %v478
        %480 = vst [vmem:[%s188] sm:$0xf] %v479
        %s481 = sand.u32 %s115, 1
        %s482 = scalar_lea.sflag [#allocation3], %s481
        %s483 = sand.u32 %s115, 1
        %s484 = smul.addr %s483, 4
        %s485 = scalar_lea.vmem [#allocation2], %s484
        // Predicated region
        $region37: #{tpu_custom_call.1} parent=35 // pred_check
          %p486 = pneg %p125
        $region38: #{tpu_custom_call.1} parent=35 // pred_check_branch
          %488 = sbr.rel (%p486) target = $region40
        $region39: #{tpu_custom_call.1} parent=35 // pred_region
          %s490 = ssub.s32 64, 64
          %491 = vsyncadd %s482, %s490
          %s492 = smul.addr %s18, 64
          %s493 = scalar_lea.hbm %s4, %s492
          %s495 = sshll.u32 %s485, 4
          %s496 = int_to_ptr.vmem [resolvable:$true] %s495
          %498 = dma.vmem_to_hbm [thread:$0]  %s496, 64, %s493, %s482
        $region40: #{tpu_custom_call.1} parent=35 // pred_fallthru
          _
      $region36: #{tpu_custom_call.1} parent=5 // pred_fallthru
        _
      %p499 = scmp.le.s32.totalorder 2, %s13
      // Predicated region
      $region41: #{tpu_custom_call.1} parent=5 // pred_check
        %p500 = pneg %p499
      $region42: #{tpu_custom_call.1} parent=5 // pred_check_branch
        %502 = sbr.rel (%p500) target = $region44
      $region43: #{tpu_custom_call.1} parent=5 // pred_region
        %s503 = ssub.s32 %s13, 2
        // Predicated region
        $region45: #{tpu_custom_call.1} parent=43 // pred_check
          %p504 = pneg %p131
        $region46: #{tpu_custom_call.1} parent=43 // pred_check_branch
          %506 = sbr.rel (%p504) target = $region48
        $region47: #{tpu_custom_call.1} parent=43 // pred_region
          %s507 = sand.u32 %s116, 1
          %s508 = scalar_lea.sflag [#allocation3], %s507
          %s509 = sand.u32 %s116, 1
          %s510 = smul.addr %s509, 4
          %s511 = scalar_lea.vmem [#allocation2], %s510
          %512 = dma.done %s508, 64
        $region48: #{tpu_custom_call.1} parent=43 // pred_fallthru
          _
      $region44: #{tpu_custom_call.1} parent=5 // pred_fallthru
        _
    $region6: #{tpu_custom_call.1} parent=1 // loop_footer
      %s17 = sadd.s32 1, %s13
    $region7: #{tpu_custom_call.1} parent=1 // loop_footer_branch
      %12 = sbr.rel target = $region3
    $region8: #{tpu_custom_call.1} parent=1 // loop_exit
      _
    %513 = vsyncpa [#allocation3], 1
    %s514 = scalar_lea.sflag [#allocation3], 1
    %515 = vsyncpa %s514, 1

</llo_original>
